<compile_context>
chip_gen: v7x
topology: tpu7x:2x2x1
jax: 0.10.0
libtpu: 0.0.40
codegen_flags: <defaults>
</compile_context>

<pallas_src>
import functools

import jax
import jax.numpy as jnp
from jax.experimental import pallas as pl
from jax.experimental.pallas import tpu as pltpu


def _cdiv(a, b):
    return (a + b - 1) // b


def _round_up(a, b):
    return _cdiv(a, b) * b


def _soft_xent_kernel(x_ref, t_ref, o_ref, *, tn, cph, n_rows, needs_mask,
                      assume_normalized):
    """One (tn, C) tile: accumulate sum over rows of -t·log_softmax(x) into o_ref."""
    i = pl.program_id(1)  # chunk index within this row-range split

    @pl.when(i == 0)
    def _():
        o_ref[...] = jnp.zeros_like(o_ref)

    # HBM traffic stays in the input dtype; all math in f32 (cast is a no-op for f32
    # inputs and fuses into the consuming ops for bf16).
    x = x_ref[...].astype(jnp.float32)
    t = t_ref[...].astype(jnp.float32)

    # Numerically stable, max-shifted form; log_softmax is never materialized:
    #   sum(-t * (x - lse)) == sum_t * lse0 - sum(t * (x - m)),   lse = m + lse0
    # Using (x - m) inside both reductions is the better-conditioned form and is free:
    # xm is already needed for the exp.
    m = jnp.max(x, axis=-1, keepdims=True)                                # (tn, 1)
    xm = x - m                                                            # (tn, C)
    lse0 = jnp.log(jnp.sum(jnp.exp(xm), axis=-1, keepdims=True))          # (tn, 1)
    sum_txm = jnp.sum(t * xm, axis=-1, keepdims=True)                     # (tn, 1)
    if assume_normalized:
        row_loss = lse0 - sum_txm                                         # sum_t == 1
    else:
        sum_t = jnp.sum(t, axis=-1, keepdims=True)                        # (tn, 1)
        row_loss = sum_t * lse0 - sum_txm                                 # (tn, 1)

    if needs_mask:
        # Cheap (tn, 1) mask on the per-row result, NOT on the (tn, C) inputs.
        # Garbage rows of a partial / ghost tile stay confined to their own row and
        # are replaced by 0 here (select does not propagate NaN/Inf from the
        # unselected operand).
        start = (pl.program_id(0) * cph + i) * tn
        rows = start + jax.lax.broadcasted_iota(jnp.int32, (tn, 1), 0)
        row_loss = jnp.where(rows < n_rows, row_loss, 0.0)

    # Broadcast-add this tile's total into the resident (8, 128) per-split block.
    o_ref[...] += jnp.sum(row_loss)


def _choose_tiling(n_rows, tn_cap):
    """Pick (tn, n_splits, cph): row tile, #row-range splits, chunks per split.

    Whenever there are >= 2 row blocks we always use 2 splits (one per v7x
    TensorCore).  Ragged splits are handled by a clamped index_map + the row mask,
    so there is no parity search and no single-TC fallback.
    """
    if n_rows <= 8:
        return n_rows, 1, 1                       # single full-extent block
    g_target = max(2, _cdiv(n_rows, tn_cap))      # at least 2 blocks for 2 TCs
    tn = min(tn_cap, _round_up(_cdiv(n_rows, g_target), 8))
    g = _cdiv(n_rows, tn)
    n_splits = 2 if g >= 2 else 1
    cph = _cdiv(g, n_splits)
    return tn, n_splits, cph


def soft_target_cross_entropy(logits, target, *, loss_fp32=False, loss_weight=1.0,
                              assume_normalized_targets=False):
    """mean over rows of sum(-target * log_softmax(logits, axis=-1), axis=-1)."""
    assert logits.shape == target.shape
    C = logits.shape[-1]
    x2 = logits.reshape(-1, C)
    t2 = target.reshape(-1, C)
    n_rows = x2.shape[0]

    xb = jnp.dtype(x2.dtype).itemsize
    tb = jnp.dtype(t2.dtype).itemsize

    # Generation-aware VMEM budget: ~55% of per-core VMEM for the pipelined working
    # set (double-buffered inputs + ~2 f32 temporaries per element).
    try:
        vmem_cap = int(pltpu.get_tpu_info().vmem_capacity_bytes)
    except Exception:  # interpret mode / info unavailable: assume v7x's 64 MiB
        vmem_cap = 64 << 20
    budget = int(vmem_cap * 0.55)

    bytes_per_row = C * (2 * (xb + tb) + 2 * 4)
    tn_cap = (budget // bytes_per_row) // 8 * 8
    if tn_cap < 8:
        # TODO(synk): stream the class axis (second 'arbitrary' grid axis over C with
        # running max / running sums) for vocab-scale C instead of failing here.
        raise NotImplementedError(
            f"class count C={C} too large for a whole-row tile in "
            f"{vmem_cap >> 20} MiB of VMEM")
    tn_cap = min(tn_cap, 8192)

    tn, n_splits, cph = _choose_tiling(n_rows, tn_cap)
    g = _cdiv(n_rows, tn)
    total_blocks = n_splits * cph
    needs_mask = (total_blocks * tn != n_rows)

    # Scoped VMEM: double-buffered inputs + ~2 f32 temporaries + slack.
    vmem_need = 2 * tn * C * (xb + tb) + 2 * tn * C * 4 + (2 << 20)
    vmem_limit = int(min(vmem_cap - (4 << 20), max(16 << 20, vmem_need)))

    if total_blocks > g:
        # Ragged 2-way split: the last block of split 1 is a ghost; clamp its block
        # index (it harmlessly re-reads block g-1) and let the row mask zero it.
        row_idx = lambda c, i: (jnp.minimum(c * cph + i, g - 1), 0)
    else:
        row_idx = lambda c, i: (c * cph + i, 0)

    kernel = functools.partial(
        _soft_xent_kernel, tn=tn, cph=cph, n_rows=n_rows, needs_mask=needs_mask,
        assume_normalized=assume_normalized_targets)

    # Advisory cost so XLA can overlap surrounding ops around the custom call.
    cost = pl.CostEstimate(
        flops=6 * n_rows * C,
        transcendentals=n_rows * C,
        bytes_accessed=n_rows * C * (xb + tb) + n_splits * 8 * 128 * 4,
    )

    out = pl.pallas_call(
        kernel,
        out_shape=jax.ShapeDtypeStruct((n_splits * 8, 128), jnp.float32),
        grid_spec=pltpu.PrefetchScalarGridSpec(
            num_scalar_prefetch=0,
            grid=(n_splits, cph),
            in_specs=[
                pl.BlockSpec((tn, C), row_idx),
                pl.BlockSpec((tn, C), row_idx),
            ],
            out_specs=pl.BlockSpec((8, 128), lambda c, i: (c, 0)),
        ),
        compiler_params=pltpu.CompilerParams(
            dimension_semantics=("parallel", "arbitrary"),
            vmem_limit_bytes=vmem_limit,
        ),
        cost_estimate=cost,
    )(x2, t2)

    partials = out[0::8, 0]                       # one f32 partial per row-range split
    loss = partials.sum() / jnp.float32(n_rows)
    # The torch module returns the loss in x.dtype in both loss_fp32 branches; all
    # internal math here is already f32 (>= the loss_fp32 precision), so only the
    # output dtype needs matching.
    del loss_fp32
    loss = loss.astype(logits.dtype)
    if loss_weight != 1.0:
        loss = loss * jnp.asarray(loss_weight, dtype=loss.dtype)
    return loss


class SoftTargetCrossEntropyPallas:
    """Mirror of the PyTorch SoftTargetCrossEntropy module forward."""

    def __init__(self, loss_weight=1.0, loss_fp32=False):
        self.loss_weight = loss_weight if isinstance(loss_weight, float) else 1.0
        self.loss_fp32 = loss_fp32

    def __call__(self, outputs_dict):
        ret = {}
        for logit, target, loss_identification in zip(
            outputs_dict["logits"], outputs_dict["targets"], outputs_dict["loss_names"]
        ):
            loss = soft_target_cross_entropy(
                logit, target, loss_fp32=self.loss_fp32, loss_weight=self.loss_weight
            )
            loss_name = "SoftTargetCrossEntropy_Loss"
            if len(loss_identification) > 0:
                loss_name = loss_name + f" ({loss_identification})"
            ret[loss_name] = loss
        return ret


def _reference(logits, target):
    logp = jax.nn.log_softmax(logits.astype(jnp.float32), axis=-1)
    per_row = jnp.sum(-target.astype(jnp.float32) * logp, axis=-1)
    return jnp.mean(per_row)


if __name__ == "__main__":
    key = jax.random.PRNGKey(0)
    k1, k2, k3, k4, k5, k6, k7, k8 = jax.random.split(key, 8)

    # Small shapes consistent with the module (rows x classes).  Task c is rank-3
    # with a row count that is not a multiple of 8 (exercises the tail mask + ghost
    # block handling); task d uses bf16 inputs (half the HBM bytes per element).
    logits_a = jax.random.normal(k1, (16, 32), dtype=jnp.float32)
    tgt_a = jax.nn.softmax(jax.random.normal(k2, (16, 32), dtype=jnp.float32), axis=-1)

    logits_b = jax.random.normal(k3, (8, 32), dtype=jnp.float32)
    tgt_b = jax.nn.softmax(jax.random.normal(k4, (8, 32), dtype=jnp.float32), axis=-1)

    logits_c = jax.random.normal(k5, (2, 5, 32), dtype=jnp.float32)
    tgt_c = jax.nn.softmax(jax.random.normal(k6, (2, 5, 32), dtype=jnp.float32), axis=-1)

    logits_d = jax.random.normal(k7, (16, 32), dtype=jnp.float32).astype(jnp.bfloat16)
    tgt_d = jax.nn.softmax(
        jax.random.normal(k8, (16, 32), dtype=jnp.float32), axis=-1
    ).astype(jnp.bfloat16)

    module = SoftTargetCrossEntropyPallas(loss_weight=1.0, loss_fp32=False)
    outputs_dict = {
        "logits": [logits_a, logits_b, logits_c, logits_d],
        "targets": [tgt_a, tgt_b, tgt_c, tgt_d],
        "loss_names": ["task_a", "", "task_c", "task_d_bf16"],
    }

    ret = module(outputs_dict)
    jax.block_until_ready(ret)

    refs = {
        "SoftTargetCrossEntropy_Loss (task_a)": _reference(logits_a, tgt_a),
        "SoftTargetCrossEntropy_Loss": _reference(logits_b, tgt_b),
        "SoftTargetCrossEntropy_Loss (task_c)": _reference(logits_c, tgt_c),
        "SoftTargetCrossEntropy_Loss (task_d_bf16)": _reference(logits_d, tgt_d),
    }
    tols = {
        "SoftTargetCrossEntropy_Loss (task_d_bf16)": 5e-2,  # bf16 output dtype
    }
    ok = True
    for name, val in ret.items():
        atol = tols.get(name, 1e-5)
        if not jnp.allclose(jnp.asarray(val, jnp.float32), refs[name],
                            atol=atol, rtol=1e-5):
            ok = False

    if ok:
        print("KERNEL_OK")
    else:
        print("KERNEL_MISMATCH",
              {k: float(v) for k, v in ret.items()},
              {k: float(v) for k, v in refs.items()})
</pallas_src>

<mosaic_0001>
module attributes {stable_mosaic.version = 11 : i64} {
  func.func @_soft_xent_kernel(%arg0: i32, %arg1: i32, %arg2: memref<8x32xf32, #tpu.memory_space<vmem>>, %arg3: memref<8x32xf32, #tpu.memory_space<vmem>>, %arg4: memref<8x128xf32, #tpu.memory_space<vmem>>) attributes {dimension_semantics = [#tpu.dimension_semantics<parallel>, #tpu.dimension_semantics<arbitrary>], iteration_bounds = array<i64: 2, 1>, scalar_prefetch = 0 : i64, scratch_operands = 0 : i64, tpu.core_type = #tpu.core_type<tc>, window_params = [{transform_indices = @transform_0, window_bounds = array<i64: 8, 32>}, {transform_indices = @transform_1, window_bounds = array<i64: 8, 32>}, {transform_indices = @transform_2, window_bounds = array<i64: 8, 128>}]} {
    %c0_i32 = arith.constant 0 : i32
    %0 = arith.cmpi eq, %arg1, %c0_i32 : i32
    %1 = arith.extui %0 : i1 to i32
    %c0_i32_0 = arith.constant 0 : i32
    %2 = arith.cmpi ne, %1, %c0_i32_0 : i32
    scf.if %2 {
      %cst_12 = arith.constant 0.000000e+00 : f32
      %28 = vector.broadcast %cst_12 : f32 to vector<8x128xf32>
      %c0_13 = arith.constant 0 : index
      %c0_14 = arith.constant 0 : index
      %29 = vector.load %arg4[%c0_13, %c0_14] : memref<8x128xf32, #tpu.memory_space<vmem>>, vector<8x128xf32>
      tpu.vector_store %arg4[%c0_13, %c0_14], %28 {strides = array<i32>} : memref<8x128xf32, #tpu.memory_space<vmem>>, vector<8x128xf32>,
    } else {
    }
    %c0 = arith.constant 0 : index
    %c0_1 = arith.constant 0 : index
    %3 = vector.load %arg2[%c0, %c0_1] : memref<8x32xf32, #tpu.memory_space<vmem>>, vector<8x32xf32>
    %c0_2 = arith.constant 0 : index
    %c0_3 = arith.constant 0 : index
    %4 = vector.load %arg3[%c0_2, %c0_3] : memref<8x32xf32, #tpu.memory_space<vmem>>, vector<8x32xf32>
    %cst = arith.constant dense<0xFF800000> : vector<8xf32>
    %5 = vector.multi_reduction <maximumf>, %3, %cst [1] : vector<8x32xf32> to vector<8xf32>
    %6 = vector.shape_cast %5 : vector<8xf32> to vector<8x1xf32>
    %7 = vector.broadcast %6 : vector<8x1xf32> to vector<8x32xf32>
    %8 = arith.subf %3, %7 : vector<8x32xf32>
    %9 = math.exp %8 : vector<8x32xf32>
    %cst_4 = arith.constant dense<0.000000e+00> : vector<8xf32>
    %10 = vector.multi_reduction <add>, %9, %cst_4 [1] : vector<8x32xf32> to vector<8xf32>
    %11 = vector.shape_cast %10 : vector<8xf32> to vector<8x1xf32>
    %12 = math.log %11 : vector<8x1xf32>
    %13 = arith.mulf %4, %8 : vector<8x32xf32>
    %cst_5 = arith.constant dense<0.000000e+00> : vector<8xf32>
    %14 = vector.multi_reduction <add>, %13, %cst_5 [1] : vector<8x32xf32> to vector<8xf32>
    %15 = vector.shape_cast %14 : vector<8xf32> to vector<8x1xf32>
    %cst_6 = arith.constant dense<0.000000e+00> : vector<8xf32>
    %16 = vector.multi_reduction <add>, %4, %cst_6 [1] : vector<8x32xf32> to vector<8xf32>
    %17 = vector.shape_cast %16 : vector<8xf32> to vector<8x1xf32>
    %18 = arith.mulf %17, %12 : vector<8x1xf32>
    %19 = arith.subf %18, %15 : vector<8x1xf32>
    %c0_7 = arith.constant 0 : index
    %c0_8 = arith.constant 0 : index
    %20 = vector.load %arg4[%c0_7, %c0_8] : memref<8x128xf32, #tpu.memory_space<vmem>>, vector<8x128xf32>
    %21 = vector.shape_cast %19 : vector<8x1xf32> to vector<1x8x1xf32>
    %cst_9 = arith.constant dense<0.000000e+00> : vector<1xf32>
    %22 = vector.multi_reduction <add>, %21, %cst_9 [1, 2] : vector<1x8x1xf32> to vector<1xf32>
    %23 = vector.shape_cast %22 : vector<1xf32> to vector<1x1x1xf32>
    %24 = vector.extract %23[0, 0, 0] : f32 from vector<1x1x1xf32>
    %25 = vector.broadcast %24 : f32 to vector<8x128xf32>
    %26 = arith.addf %20, %25 : vector<8x128xf32>
    %c0_10 = arith.constant 0 : index
    %c0_11 = arith.constant 0 : index
    %27 = vector.load %arg4[%c0_10, %c0_11] : memref<8x128xf32, #tpu.memory_space<vmem>>, vector<8x128xf32>
    tpu.vector_store %arg4[%c0_10, %c0_11], %26 {strides = array<i32>} : memref<8x128xf32, #tpu.memory_space<vmem>>, vector<8x128xf32>,
    return
  }
  func.func @transform_0(%arg0: i32, %arg1: i32) -> (i32, i32) {
    %c1_i32 = arith.constant 1 : i32
    %0 = arith.muli %arg0, %c1_i32 : i32
    %1 = arith.addi %0, %arg1 : i32
    %c0_i32 = arith.constant 0 : i32
    %c0_i32_0 = arith.constant 0 : i32
    return %1, %c0_i32 : i32, i32
  }
  func.func @transform_1(%arg0: i32, %arg1: i32) -> (i32, i32) {
    %c1_i32 = arith.constant 1 : i32
    %0 = arith.muli %arg0, %c1_i32 : i32
    %1 = arith.addi %0, %arg1 : i32
    %c0_i32 = arith.constant 0 : i32
    %c0_i32_0 = arith.constant 0 : i32
    return %1, %c0_i32 : i32, i32
  }
  func.func @transform_2(%arg0: i32, %arg1: i32) -> (i32, i32) {
    %c0_i32 = arith.constant 0 : i32
    %c0_i32_0 = arith.constant 0 : i32
    return %arg0, %c0_i32 : i32, i32
  }
}

</mosaic_0001>

<llo_original>
// kernel: tpu_custom_call.1
$region0: #{tpu_custom_call.1}
  #allocation0 [shape = 'u32[]', space=smem, size = 0x4, offset = 0x4, fixed_abs, tag = 'smem constant byte address 0x4 - core index']
  #allocation1 [shape = 'u32[144,128]{1,0:T(1,128)}', space=vmem, size = 0x12000, scoped, tag = 'internal scratch']
  %s0 = inlined_call_operand.hbm [shape: f32[16,32], index: 0, kind: input, shape index: {}]
  %s1 = inlined_call_operand.hbm [shape: f32[16,32], index: 1, kind: input, shape index: {}]
  %s2 = inlined_call_operand.hbm [shape: f32[16,128], index: 2, kind: output, shape index: {}]
  %s3 = sld [smem:[#allocation0]]
  $region53: #{tpu_custom_call.1} parent=0
    _
  %s5 = ssub.s32 1, %s3
  %s6 = scalar_select 0, %s5, %s3
  $region1: #{tpu_custom_call.1} parent=0
    #allocation2 [shape = 'u8[8192]{0}', space=vmem, size = 0x2000, scoped, tag = 'input window, operand 0']
    #allocation3 [shape = 's32[2]{0}', space=sflag, size = 0x8, scoped, tag = 'scoped memory for tpu_custom_call.1']
    #allocation4 [shape = 's32[2]{0}', space=sflag, size = 0x8, scoped, tag = 'scoped memory for tpu_custom_call.1']
    #allocation5 [shape = 'u8[8192]{0}', space=vmem, size = 0x2000, scoped, tag = 'input window, operand 1']
    #allocation6 [shape = 's32[2]{0}', space=sflag, size = 0x8, scoped, tag = 'scoped memory for tpu_custom_call.1']
    #allocation7 [shape = 'u8[8192]{0}', space=vmem, size = 0x2000, scoped, tag = 'output window, operand 0']
    %7 = vsyncpa [#allocation3], 0
    %s8 = scalar_lea.sflag [#allocation3], 1
    %9 = vsyncpa %s8, 0
    %10 = vsyncpa [#allocation6], 0
    %s11 = scalar_lea.sflag [#allocation6], 1
    %12 = vsyncpa %s11, 0
    %13 = vsyncpa [#allocation4], 0
    %s14 = scalar_lea.sflag [#allocation4], 1
    %15 = vsyncpa %s14, 0
    loop: start=0, step=1, limit=4
    $region2: #{tpu_custom_call.1} parent=1 // loop_pre_header
      _
    $region3: #{tpu_custom_call.1} parent=1 // loop_header
      %s17 = sphi 0, %s21
      %p18 = scmp.ge.s32.totalorder %s17, 4
      %s24 = sphi 0, %s36
      %s25 = sphi 0, %s32
      %s26 = sphi 0, %s24
      %s27 = sphi 0, %s25
      %s28 = sphi 0, %s26
      %s29 = sphi 0, %s27
      %s41 = sphi 0, %s43
      %s44 = sphi 0, %s41
      %s45 = sphi 0, %s44
      %s61 = sphi 0, %s45
      %s69 = sphi 0, %s71
      %s72 = sphi 0, %s69
      %s73 = sphi 0, %s72
      %s89 = sphi 0, %s73
      %s95 = sphi 0, %s97
      %s98 = sphi 0, %s95
      %s99 = sphi 0, %s98
      %s115 = sphi 0, %s99
    $region4: #{tpu_custom_call.1} parent=1 // loop_header_branch
      %20 = sbr.rel (%p18) target = $region8
    $region5: #{tpu_custom_call.1} parent=1 // loop_body
      %s22 = ssub.s32 %s17, 1
      %s23 = ssub.s32 %s17, 2
      %s30 = sadd.s32 1, %s25
      %p31 = scmp.ge.s32.totalorder %s30, 1
      %s32 = scalar_select %p31, 0, %s30
      %s33 = sadd.s32 1, %s24
      %s34 = scalar_select %p31, %s33, %s24
      %p35 = scmp.ge.s32.totalorder %s34, 2
      %s36 = scalar_select %p35, 0, %s34
      %s37 = sadd.s32 %s24, %s25
      %s38 = sadd.s32 %s36, %s32
      %s39 = ssub.s32 %s37, %s38
      %p40 = scmp.eq.s32.totalorder %s39, 0
      %s42 = sadd.s32 %s41, 1
      %s43 = scalar_select %p40, %s41, %s42
      %p46 = pneg %p40
      %p47 = scmp.eq.s32.totalorder %s17, 1
      %p48 = por %p46, %p47
      %p49 = scmp.ne.s32.totalorder %s41, %s44
      %p50 = scmp.eq.s32.totalorder %s17, 0
      %p51 = por %p49, %p50
      %p52 = scmp.ne.s32.totalorder %s41, %s44
      %p53 = scmp.eq.s32.totalorder %s22, 1
      %p54 = por %p52, %p53
      %p55 = scmp.ne.s32.totalorder %s44, %s45
      %p56 = scmp.eq.s32.totalorder %s22, 0
      %p57 = por %p55, %p56
      %p58 = scmp.ne.s32.totalorder %s44, %s45
      %p59 = scmp.eq.s32.totalorder %s23, 1
      %p60 = por %p58, %p59
      %p62 = scmp.ne.s32.totalorder %s45, %s61
      %p63 = scmp.eq.s32.totalorder %s23, 0
      %p64 = por %p62, %p63
      %s65 = sadd.s32 %s24, %s25
      %s66 = sadd.s32 %s36, %s32
      %s67 = ssub.s32 %s65, %s66
      %p68 = scmp.eq.s32.totalorder %s67, 0
      %s70 = sadd.s32 %s69, 1
      %s71 = scalar_select %p68, %s69, %s70
      %p74 = pneg %p68
      %p75 = scmp.eq.s32.totalorder %s17, 1
      %p76 = por %p74, %p75
      %p77 = scmp.ne.s32.totalorder %s69, %s72
      %p78 = scmp.eq.s32.totalorder %s17, 0
      %p79 = por %p77, %p78
      %p80 = scmp.ne.s32.totalorder %s69, %s72
      %p81 = scmp.eq.s32.totalorder %s22, 1
      %p82 = por %p80, %p81
      %p83 = scmp.ne.s32.totalorder %s72, %s73
      %p84 = scmp.eq.s32.totalorder %s22, 0
      %p85 = por %p83, %p84
      %p86 = scmp.ne.s32.totalorder %s72, %s73
      %p87 = scmp.eq.s32.totalorder %s23, 1
      %p88 = por %p86, %p87
      %p90 = scmp.ne.s32.totalorder %s73, %s89
      %p91 = scmp.eq.s32.totalorder %s23, 0
      %p92 = por %p90, %p91
      %s93 = ssub.s32 %s24, %s36
      %p94 = scmp.eq.s32.totalorder %s93, 0
      %s96 = sadd.s32 %s95, 1
      %s97 = scalar_select %p94, %s95, %s96
      %p100 = pneg %p94
      %p101 = scmp.eq.s32.totalorder %s17, 1
      %p102 = por %p100, %p101
      %p103 = scmp.ne.s32.totalorder %s95, %s98
      %p104 = scmp.eq.s32.totalorder %s17, 0
      %p105 = por %p103, %p104
      %p106 = scmp.ne.s32.totalorder %s95, %s98
      %p107 = scmp.eq.s32.totalorder %s22, 1
      %p108 = por %p106, %p107
      %p109 = scmp.ne.s32.totalorder %s98, %s99
      %p110 = scmp.eq.s32.totalorder %s22, 0
      %p111 = por %p109, %p110
      %p112 = scmp.ne.s32.totalorder %s98, %s99
      %p113 = scmp.eq.s32.totalorder %s23, 1
      %p114 = por %p112, %p113
      %p116 = scmp.ne.s32.totalorder %s99, %s115
      %p117 = scmp.eq.s32.totalorder %s23, 0
      %p118 = por %p116, %p117
      %p119 = scmp.le.s32.totalorder 1, %s17
      %p120 = scmp.lt.s32.totalorder %s17, 3
      %p121 = pnand %p119, %p120
      %p122 = pneg %p121
      // Predicated region
      $region9: #{tpu_custom_call.1} parent=5 // pred_check
        _
      $region10: #{tpu_custom_call.1} parent=5 // pred_check_branch
        %124 = sbr.rel (%p121) target = $region12
      $region11: #{tpu_custom_call.1} parent=5 // pred_region
        %s125 = ssub.s32 %s17, 1
      $region12: #{tpu_custom_call.1} parent=5 // pred_fallthru
        _
      %p126 = scmp.lt.s32.totalorder %s17, 2
      // Predicated region
      $region13: #{tpu_custom_call.1} parent=5 // pred_check
        %p127 = pneg %p126
      $region14: #{tpu_custom_call.1} parent=5 // pred_check_branch
        %129 = sbr.rel (%p127) target = $region16
      $region15: #{tpu_custom_call.1} parent=5 // pred_region
        // Predicated region
        $region17: #{tpu_custom_call.1} parent=15 // pred_check
          %p130 = pneg %p51
        $region18: #{tpu_custom_call.1} parent=15 // pred_check_branch
          %132 = sbr.rel (%p130) target = $region20
        $region19: #{tpu_custom_call.1} parent=15 // pred_region
          %s133 = sand.u32 %s41, 1
          %s134 = scalar_lea.sflag [#allocation3], %s133
          %s135 = sand.u32 %s41, 1
          %s136 = smul.addr %s135, 8
          %s137 = scalar_lea.vmem [#allocation2], %s136
          %s138 = sadd.s32 %s24, %s25
          %s140 = ssub.s32 128, 128
          %141 = vsyncadd %s134, %s140
          %s142 = smul.addr %s138, 128
          %s143 = scalar_lea.hbm %s0, %s142
          %s145 = sshll.u32 %s137, 4
          %s146 = int_to_ptr.vmem [resolvable:$true] %s145
          %148 = dma.hbm_to_vmem [thread:$0]  %s143, 128, %s146, %s134
        $region20: #{tpu_custom_call.1} parent=15 // pred_fallthru
          _
        // Predicated region
        $region21: #{tpu_custom_call.1} parent=15 // pred_check
          %p149 = pneg %p79
        $region22: #{tpu_custom_call.1} parent=15 // pred_check_branch
          %151 = sbr.rel (%p149) target = $region24
        $region23: #{tpu_custom_call.1} parent=15 // pred_region
          %s152 = sand.u32 %s69, 1
          %s153 = scalar_lea.sflag [#allocation6], %s152
          %s154 = sand.u32 %s69, 1
          %s155 = smul.addr %s154, 8
          %s156 = scalar_lea.vmem [#allocation5], %s155
          %s157 = sadd.s32 %s24, %s25
          %s159 = ssub.s32 128, 128
          %160 = vsyncadd %s153, %s159
          %s161 = smul.addr %s157, 128
          %s162 = scalar_lea.hbm %s1, %s161
          %s164 = sshll.u32 %s156, 4
          %s165 = int_to_ptr.vmem [resolvable:$true] %s164
          %167 = dma.hbm_to_vmem [thread:$0]  %s162, 128, %s165, %s153
        $region24: #{tpu_custom_call.1} parent=15 // pred_fallthru
          _
      $region16: #{tpu_custom_call.1} parent=5 // pred_fallthru
        _
      %p168 = scmp.le.s32.totalorder 1, %s17
      %p169 = scmp.lt.s32.totalorder %s17, 3
      %p170 = pnand %p168, %p169
      %p171 = pneg %p170
      // Predicated region
      $region25: #{tpu_custom_call.1} parent=5 // pred_check
        _
      $region26: #{tpu_custom_call.1} parent=5 // pred_check_branch
        %173 = sbr.rel (%p170) target = $region28
      $region27: #{tpu_custom_call.1} parent=5 // pred_region
        %s174 = ssub.s32 %s17, 1
        %s175 = sand.u32 %s44, 1
        %s176 = scalar_lea.sflag [#allocation3], %s175
        %s177 = sand.u32 %s44, 1
        %s178 = smul.addr %s177, 8
        %s179 = scalar_lea.vmem [#allocation2], %s178
        // Predicated region
        $region29: #{tpu_custom_call.1} parent=27 // pred_check
          %p180 = pneg %p57
        $region30: #{tpu_custom_call.1} parent=27 // pred_check_branch
          %182 = sbr.rel (%p180) target = $region32
        $region31: #{tpu_custom_call.1} parent=27 // pred_region
          %183 = dma.done %s176, 128
        $region32: #{tpu_custom_call.1} parent=27 // pred_fallthru
          _
        %s184 = sand.u32 %s72, 1
        %s185 = scalar_lea.sflag [#allocation6], %s184
        %s186 = sand.u32 %s72, 1
        %s187 = smul.addr %s186, 8
        %s188 = scalar_lea.vmem [#allocation5], %s187
        // Predicated region
        $region33: #{tpu_custom_call.1} parent=27 // pred_check
          %p189 = pneg %p85
        $region34: #{tpu_custom_call.1} parent=27 // pred_check_branch
          %191 = sbr.rel (%p189) target = $region36
        $region35: #{tpu_custom_call.1} parent=27 // pred_region
          %192 = dma.done %s185, 128
        $region36: #{tpu_custom_call.1} parent=27 // pred_fallthru
          _
        %s193 = sand.u32 %s44, 1
        %s194 = scalar_lea.sflag [#allocation3], %s193
        %s195 = sand.u32 %s44, 1
        %s196 = smul.addr %s195, 8
        %s197 = scalar_lea.vmem [#allocation2], %s196
        %p198 = pneg %p57
        %p199 = pneg %p54
        %s200 = sand.u32 %s72, 1
        %s201 = scalar_lea.sflag [#allocation6], %s200
        %s202 = sand.u32 %s72, 1
        %s203 = smul.addr %s202, 8
        %s204 = scalar_lea.vmem [#allocation5], %s203
        %p205 = pneg %p85
        %p206 = pneg %p82
        %p207 = pneg %p111
        %p208 = pneg %p108
        %s209 = sand.u32 %s98, 1
        %s210 = scalar_lea.sflag [#allocation4], %s209
        %s211 = sand.u32 %s98, 1
        %s212 = smul.addr %s211, 8
        %s213 = scalar_lea.vmem [#allocation7], %s212
        %s214 = sadd.s32 %s26, %s27
        %s215 = sadd.s32 %s26, %s27
        %p216 = scmp.eq.s32.totalorder %s27, 0
        // Predicated region
        $region37: #{tpu_custom_call.1} parent=27 // pred_check
          %p217 = pneg %p216
        $region38: #{tpu_custom_call.1} parent=27 // pred_check_branch
          %219 = sbr.rel (%p217) target = $region40
        $region39: #{tpu_custom_call.1} parent=27 // pred_region
          %220 = vst [vmem:[%s213] sm:$0xff] 0.0
        $region40: #{tpu_custom_call.1} parent=27 // pred_fallthru
          _
        %v221 = vld [vmem:[%s179] sm:$0xff]
        %v222 = vld [vmem:[%s188] sm:$0xff]
        %vm223 = vcmask 261120
        %v224 = vsel %vm223, %v221, -inf
        %225 = vmax.xlane.f32.xlu0 %v224
        %v226 = vpop.xlane.xlu0 %225
        %v227 = vsub.f32 %v221, %v226
        %v228 = vmul.f32 %v227, 1.442695
        %v229 = vpow.pop %v228
        %v230 = vsel %vm223, %v229, 0.0
        %231 = vadd.xlane.f32.xlu0 %v230
        %v232 = vpop.xlane.xlu0 %231
        %v233 = vlog2.pop %v232
        %v234 = vmul.f32 %v233, 0.6931472
        %v235 = vmul.f32 %v222, %v227
        %v236 = vsel %vm223, %v235, 0.0
        %237 = vadd.xlane.f32.xlu0 %v236
        %v238 = vpop.xlane.xlu0 %237
        %v239 = vsel %vm223, %v222, 0.0
        %240 = vadd.xlane.f32.xlu0 %v239
        %v241 = vpop.xlane.xlu0 %240
        %v242 = vmul.f32 %v241, %v234
        %v243 = vsub.f32 %v242, %v238
        %v244 = vld [vmem:[%s213] sm:$0xff]
        %vm245 = vcmask 7168
        %v246 = vsel %vm245, %v243, 0.0
        %247 = vadd.xlane.f32.xlu0 %v246
        %v248 = vpop.xlane.xlu0 %247
        %v249 = vrot.slane %v248, 4
        %v250 = vadd.f32 %v248, %v249
        %v251 = vrot.slane %v250, 2
        %v252 = vadd.f32 %v250, %v251
        %v253 = vrot.slane %v252, 1
        %v254 = vadd.f32 %v252, %v253
        %s255 = vtos %v254
        %v256 = vstv %s255
        %v257 = vadd.f32 %v244, %v256
        %258 = vst [vmem:[%s213] sm:$0xff] %v257
        %s259 = sand.u32 %s98, 1
        %s260 = scalar_lea.sflag [#allocation4], %s259
        %s261 = sand.u32 %s98, 1
        %s262 = smul.addr %s261, 8
        %s263 = scalar_lea.vmem [#allocation7], %s262
        // Predicated region
        $region41: #{tpu_custom_call.1} parent=27 // pred_check
          %p264 = pneg %p108
        $region42: #{tpu_custom_call.1} parent=27 // pred_check_branch
          %266 = sbr.rel (%p264) target = $region44
        $region43: #{tpu_custom_call.1} parent=27 // pred_region
          %s268 = ssub.s32 128, 128
          %269 = vsyncadd %s260, %s268
          %s270 = smul.addr %s26, 128
          %s271 = scalar_lea.hbm %s2, %s270
          %s273 = sshll.u32 %s263, 4
          %s274 = int_to_ptr.vmem [resolvable:$true] %s273
          %276 = dma.vmem_to_hbm [thread:$0]  %s274, 128, %s271, %s260
        $region44: #{tpu_custom_call.1} parent=27 // pred_fallthru
          _
      $region28: #{tpu_custom_call.1} parent=5 // pred_fallthru
        _
      %p277 = scmp.le.s32.totalorder 2, %s17
      // Predicated region
      $region45: #{tpu_custom_call.1} parent=5 // pred_check
        %p278 = pneg %p277
      $region46: #{tpu_custom_call.1} parent=5 // pred_check_branch
        %280 = sbr.rel (%p278) target = $region48
      $region47: #{tpu_custom_call.1} parent=5 // pred_region
        %s281 = ssub.s32 %s17, 2
        // Predicated region
        $region49: #{tpu_custom_call.1} parent=47 // pred_check
          %p282 = pneg %p114
        $region50: #{tpu_custom_call.1} parent=47 // pred_check_branch
          %284 = sbr.rel (%p282) target = $region52
        $region51: #{tpu_custom_call.1} parent=47 // pred_region
          %s285 = sand.u32 %s99, 1
          %s286 = scalar_lea.sflag [#allocation4], %s285
          %s287 = sand.u32 %s99, 1
          %s288 = smul.addr %s287, 8
          %s289 = scalar_lea.vmem [#allocation7], %s288
          %290 = dma.done %s286, 128
        $region52: #{tpu_custom_call.1} parent=47 // pred_fallthru
          _
      $region48: #{tpu_custom_call.1} parent=5 // pred_fallthru
        _
    $region6: #{tpu_custom_call.1} parent=1 // loop_footer
      %s21 = sadd.s32 1, %s17
    $region7: #{tpu_custom_call.1} parent=1 // loop_footer_branch
      %16 = sbr.rel target = $region3
    $region8: #{tpu_custom_call.1} parent=1 // loop_exit
      _
    %291 = vsyncpa [#allocation3], 1
    %s292 = scalar_lea.sflag [#allocation3], 1
    %293 = vsyncpa %s292, 1
    %294 = vsyncpa [#allocation6], 1
    %s295 = scalar_lea.sflag [#allocation6], 1
    %296 = vsyncpa %s295, 1
    %297 = vsyncpa [#allocation4], 1
    %s298 = scalar_lea.sflag [#allocation4], 1
    %299 = vsyncpa %s298, 1

</llo_original>
